<compile_context>
chip_gen: v6e
topology: v6e:2x2x1
jax: 0.10.0
libtpu: 0.0.40
codegen_flags: <defaults>
</compile_context>

<pallas_src>
import functools

import jax
import jax.numpy as jnp
from jax.experimental import pallas as pl
from jax.experimental.pallas import tpu as pltpu

MAX_ACTION = 2.0
P = 128                     # padded hidden width = one full lane tile
BIAS_ROW = 120              # spare (zero) row of each weight tile that holds the bias
LAYER_DIMS = [20, 20, 10]   # hidden sizes of linear1..linear3


def _round_up(x, m):
    return (x + m - 1) // m * m


def actor_kernel(x_ref, w_ref, out_ref, *, obs_pad, act_pad):
    # x_ref:   (TB, obs_pad)  raw observations (zero-padded lanes)
    # w_ref:   (4, P, P)      packed weight slab; layer-i bias in row BIAS_ROW
    # out_ref: (TB, act_pad)  narrow output (post-kernel slice to action_dim)
    x = x_ref[...]

    # Layer 1: contract only over the real (padded-to-8) obs lanes.
    h = jnp.maximum(
        jnp.dot(x, w_ref[0, :obs_pad, :], preferred_element_type=jnp.float32)
        + w_ref[0, BIAS_ROW:BIAS_ROW + 1, :], 0.0)
    # Layers 2-3: padded lanes of h are exactly 0, so the full-tile dot is safe.
    h = jnp.maximum(
        jnp.dot(h, w_ref[1], preferred_element_type=jnp.float32)
        + w_ref[1, BIAS_ROW:BIAS_ROW + 1, :], 0.0)
    h = jnp.maximum(
        jnp.dot(h, w_ref[2], preferred_element_type=jnp.float32)
        + w_ref[2, BIAS_ROW:BIAS_ROW + 1, :], 0.0)
    # Layer 4 + tanh (tanh rides the otherwise-idle EUP slot).
    a = (jnp.dot(h, w_ref[3], preferred_element_type=jnp.float32)
         + w_ref[3, BIAS_ROW:BIAS_ROW + 1, :])[:, :act_pad]
    out_ref[...] = MAX_ACTION * jnp.tanh(a)


def init_params(key, obs_dim, action_dim):
    """Deterministic init mimicking nn.Linear default: U(-1/sqrt(fan_in), 1/sqrt(fan_in))."""
    dims = [(obs_dim, LAYER_DIMS[0]),
            (LAYER_DIMS[0], LAYER_DIMS[1]),
            (LAYER_DIMS[1], LAYER_DIMS[2]),
            (LAYER_DIMS[2], action_dim)]
    params = {}
    for i, (fin, fout) in enumerate(dims, start=1):
        key, kw, kb = jax.random.split(key, 3)
        bound = 1.0 / jnp.sqrt(jnp.float32(fin))
        params[f"w{i}"] = jax.random.uniform(kw, (fin, fout), jnp.float32, -bound, bound)
        params[f"b{i}"] = jax.random.uniform(kb, (fout,), jnp.float32, -bound, bound)
    return params


def pack_params(params, obs_dim, action_dim):
    """Pack 4 (W, b) pairs into one zero-padded (4, P, P) slab (bias in row BIAS_ROW)."""
    dims = [(obs_dim, LAYER_DIMS[0]),
            (LAYER_DIMS[0], LAYER_DIMS[1]),
            (LAYER_DIMS[1], LAYER_DIMS[2]),
            (LAYER_DIMS[2], action_dim)]
    obs_pad = _round_up(obs_dim, 8)
    assert max(obs_pad, action_dim, *LAYER_DIMS) <= BIAS_ROW
    slab = jnp.zeros((4, P, P), jnp.float32)
    for i, (fin, fout) in enumerate(dims):
        slab = slab.at[i, :fin, :fout].set(params[f"w{i + 1}"])
        slab = slab.at[i, BIAS_ROW, :fout].set(params[f"b{i + 1}"])
    return slab


def actor_forward(obs, w_slab, action_dim, max_block=1024):
    """obs: (B, obs_dim) f32. w_slab: packed (4, P, P) params. Returns (B, action_dim)."""
    B, obs_dim = obs.shape
    obs_pad = _round_up(obs_dim, 8)
    act_pad = _round_up(action_dim, 8)

    # Batch tiling: multiple of 8 rows, up to `max_block`, capped at ~half the
    # padded batch so larger batches always yield >=2 grid blocks (v7x has two
    # TensorCores; v5e/v6e just see a short sequential grid).
    bp8 = _round_up(B, 8)
    if bp8 <= 16:
        tb = bp8
    else:
        tb = min(max_block, _round_up(pl.cdiv(bp8, 2), 8))
    grid_n = pl.cdiv(bp8, tb)
    bp = grid_n * tb                     # tail waste is < tb and <= ~half a tile

    # Cheap batch/lane pad of the *narrow* obs array (no 128-lane blow-up).
    x = jnp.zeros((bp, obs_pad), jnp.float32).at[:B, :obs_dim].set(obs)

    # Advisory cost of the padded work actually executed.
    flops = 2 * bp * P * (obs_pad + 3 * P)
    bytes_accessed = 4 * (bp * obs_pad + bp * act_pad + 4 * P * P)

    out = pl.pallas_call(
        functools.partial(actor_kernel, obs_pad=obs_pad, act_pad=act_pad),
        out_shape=jax.ShapeDtypeStruct((bp, act_pad), jnp.float32),
        grid=(grid_n,),
        in_specs=[
            pl.BlockSpec((tb, obs_pad), lambda i: (i, 0)),   # activation stream
            pl.BlockSpec((4, P, P), lambda i: (0, 0, 0)),    # weights resident in VMEM
        ],
        out_specs=pl.BlockSpec((tb, act_pad), lambda i: (i, 0)),
        compiler_params=pltpu.CompilerParams(
            dimension_semantics=("parallel",)),
        cost_estimate=pl.CostEstimate(
            flops=int(flops),
            transcendentals=int(bp * act_pad),
            bytes_accessed=int(bytes_accessed)),
    )(x, w_slab)

    return out[:B, :action_dim]


def actor_reference(obs, params):
    h = jnp.maximum(obs @ params["w1"] + params["b1"], 0.0)
    h = jnp.maximum(h @ params["w2"] + params["b2"], 0.0)
    h = jnp.maximum(h @ params["w3"] + params["b3"], 0.0)
    return MAX_ACTION * jnp.tanh(h @ params["w4"] + params["b4"])


if __name__ == "__main__":
    key = jax.random.PRNGKey(0)
    key, k_obs, k_params = jax.random.split(key, 3)

    batch = 2
    obs_dim = 8
    action_dim = 4

    obs = jax.random.normal(k_obs, (batch, obs_dim), jnp.float32)
    params = init_params(k_params, obs_dim, action_dim)
    w_slab = pack_params(params, obs_dim, action_dim)

    out = jax.block_until_ready(actor_forward(obs, w_slab, action_dim))
    ref = actor_reference(obs, params)
    assert out.shape == (batch, action_dim)
    assert jnp.allclose(out, ref, atol=1e-4, rtol=1e-4)

    # also exercise the multi-block grid path (2 grid steps, resident weights,
    # both v7x TensorCores busy)
    key, k_big = jax.random.split(key)
    obs_big = jax.random.normal(k_big, (300, obs_dim), jnp.float32)
    out_big = jax.block_until_ready(actor_forward(obs_big, w_slab, action_dim))
    ref_big = actor_reference(obs_big, params)
    assert out_big.shape == (300, action_dim)
    assert jnp.allclose(out_big, ref_big, atol=1e-4, rtol=1e-4)

    print("KERNEL_OK")
</pallas_src>

<mosaic_0001>
module attributes {stable_mosaic.version = 11 : i64} {
  func.func @actor_kernel(%arg0: i32, %arg1: memref<8x8xf32, #tpu.memory_space<vmem>>, %arg2: memref<4x128x128xf32, #tpu.memory_space<vmem>>, %arg3: memref<8x8xf32, #tpu.memory_space<vmem>>) attributes {dimension_semantics = [#tpu.dimension_semantics<parallel>], iteration_bounds = array<i64: 1>, scalar_prefetch = 0 : i64, scratch_operands = 0 : i64, tpu.core_type = #tpu.core_type<tc>, window_params = [{transform_indices = @transform_0, window_bounds = array<i64: 8, 8>}, {pipeline_mode = #tpu.pipeline_mode<synchronous>, transform_indices = @transform_1, window_bounds = array<i64: 4, 128, 128>}, {transform_indices = @transform_2, window_bounds = array<i64: 8, 8>}]} {
    %c0 = arith.constant 0 : index
    %c0_0 = arith.constant 0 : index
    %0 = vector.load %arg1[%c0, %c0_0] : memref<8x8xf32, #tpu.memory_space<vmem>>, vector<8x8xf32>
    %c0_1 = arith.constant 0 : index
    %c0_2 = arith.constant 0 : index
    %c0_3 = arith.constant 0 : index
    %1 = vector.load %arg2[%c0_1, %c0_2, %c0_3] : memref<4x128x128xf32, #tpu.memory_space<vmem>>, vector<1x8x128xf32>
    %2 = vector.shape_cast %1 : vector<1x8x128xf32> to vector<8x128xf32>
    %cst = arith.constant dense<0.000000e+00> : vector<8x128xf32>
    %3 = tpu.matmul %0, %2, %cst {dimension_numbers = #tpu.dot_dimension_numbers<[1], [0], [0], [1], [0, 0, 1, 1], [], []>} : vector<8x8xf32>, vector<8x128xf32>, vector<8x128xf32> -> vector<8x128xf32>
    %c0_4 = arith.constant 0 : index
    %c120 = arith.constant 120 : index
    %c0_5 = arith.constant 0 : index
    %4 = vector.load %arg2[%c0_4, %c120, %c0_5] : memref<4x128x128xf32, #tpu.memory_space<vmem>>, vector<1x1x128xf32>
    %5 = vector.shape_cast %4 : vector<1x1x128xf32> to vector<1x128xf32>
    %6 = vector.broadcast %5 : vector<1x128xf32> to vector<8x128xf32>
    %7 = arith.addf %3, %6 : vector<8x128xf32>
    %cst_6 = arith.constant 0.000000e+00 : f32
    %8 = vector.broadcast %cst_6 : f32 to vector<8x128xf32>
    %9 = arith.maximumf %7, %8 : vector<8x128xf32>
    %c1 = arith.constant 1 : index
    %c0_7 = arith.constant 0 : index
    %c0_8 = arith.constant 0 : index
    %10 = vector.load %arg2[%c1, %c0_7, %c0_8] : memref<4x128x128xf32, #tpu.memory_space<vmem>>, vector<1x128x128xf32>
    %11 = vector.shape_cast %10 : vector<1x128x128xf32> to vector<128x128xf32>
    %cst_9 = arith.constant dense<0.000000e+00> : vector<8x128xf32>
    %12 = tpu.matmul %9, %11, %cst_9 {dimension_numbers = #tpu.dot_dimension_numbers<[1], [0], [0], [1], [0, 0, 1, 1], [], []>} : vector<8x128xf32>, vector<128x128xf32>, vector<8x128xf32> -> vector<8x128xf32>
    %c1_10 = arith.constant 1 : index
    %c120_11 = arith.constant 120 : index
    %c0_12 = arith.constant 0 : index
    %13 = vector.load %arg2[%c1_10, %c120_11, %c0_12] : memref<4x128x128xf32, #tpu.memory_space<vmem>>, vector<1x1x128xf32>
    %14 = vector.shape_cast %13 : vector<1x1x128xf32> to vector<1x128xf32>
    %15 = vector.broadcast %14 : vector<1x128xf32> to vector<8x128xf32>
    %16 = arith.addf %12, %15 : vector<8x128xf32>
    %cst_13 = arith.constant 0.000000e+00 : f32
    %17 = vector.broadcast %cst_13 : f32 to vector<8x128xf32>
    %18 = arith.maximumf %16, %17 : vector<8x128xf32>
    %c2 = arith.constant 2 : index
    %c0_14 = arith.constant 0 : index
    %c0_15 = arith.constant 0 : index
    %19 = vector.load %arg2[%c2, %c0_14, %c0_15] : memref<4x128x128xf32, #tpu.memory_space<vmem>>, vector<1x128x128xf32>
    %20 = vector.shape_cast %19 : vector<1x128x128xf32> to vector<128x128xf32>
    %cst_16 = arith.constant dense<0.000000e+00> : vector<8x128xf32>
    %21 = tpu.matmul %18, %20, %cst_16 {dimension_numbers = #tpu.dot_dimension_numbers<[1], [0], [0], [1], [0, 0, 1, 1], [], []>} : vector<8x128xf32>, vector<128x128xf32>, vector<8x128xf32> -> vector<8x128xf32>
    %c2_17 = arith.constant 2 : index
    %c120_18 = arith.constant 120 : index
    %c0_19 = arith.constant 0 : index
    %22 = vector.load %arg2[%c2_17, %c120_18, %c0_19] : memref<4x128x128xf32, #tpu.memory_space<vmem>>, vector<1x1x128xf32>
    %23 = vector.shape_cast %22 : vector<1x1x128xf32> to vector<1x128xf32>
    %24 = vector.broadcast %23 : vector<1x128xf32> to vector<8x128xf32>
    %25 = arith.addf %21, %24 : vector<8x128xf32>
    %cst_20 = arith.constant 0.000000e+00 : f32
    %26 = vector.broadcast %cst_20 : f32 to vector<8x128xf32>
    %27 = arith.maximumf %25, %26 : vector<8x128xf32>
    %c3 = arith.constant 3 : index
    %c0_21 = arith.constant 0 : index
    %c0_22 = arith.constant 0 : index
    %28 = vector.load %arg2[%c3, %c0_21, %c0_22] : memref<4x128x128xf32, #tpu.memory_space<vmem>>, vector<1x128x128xf32>
    %29 = vector.shape_cast %28 : vector<1x128x128xf32> to vector<128x128xf32>
    %cst_23 = arith.constant dense<0.000000e+00> : vector<8x128xf32>
    %30 = tpu.matmul %27, %29, %cst_23 {dimension_numbers = #tpu.dot_dimension_numbers<[1], [0], [0], [1], [0, 0, 1, 1], [], []>} : vector<8x128xf32>, vector<128x128xf32>, vector<8x128xf32> -> vector<8x128xf32>
    %c3_24 = arith.constant 3 : index
    %c120_25 = arith.constant 120 : index
    %c0_26 = arith.constant 0 : index
    %31 = vector.load %arg2[%c3_24, %c120_25, %c0_26] : memref<4x128x128xf32, #tpu.memory_space<vmem>>, vector<1x1x128xf32>
    %32 = vector.shape_cast %31 : vector<1x1x128xf32> to vector<1x128xf32>
    %33 = vector.broadcast %32 : vector<1x128xf32> to vector<8x128xf32>
    %34 = arith.addf %30, %33 : vector<8x128xf32>
    %35 = vector.extract_strided_slice %34 {offsets = [0, 0], sizes = [8, 8], strides = [1, 1]} : vector<8x128xf32> to vector<8x8xf32>
    %36 = math.tanh %35 : vector<8x8xf32>
    %cst_27 = arith.constant 2.000000e+00 : f32
    %37 = vector.broadcast %cst_27 : f32 to vector<8x8xf32>
    %38 = arith.mulf %37, %36 : vector<8x8xf32>
    %c0_28 = arith.constant 0 : index
    %c0_29 = arith.constant 0 : index
    %39 = vector.load %arg3[%c0_28, %c0_29] : memref<8x8xf32, #tpu.memory_space<vmem>>, vector<8x8xf32>
    tpu.vector_store %arg3[%c0_28, %c0_29], %38 {strides = array<i32>} : memref<8x8xf32, #tpu.memory_space<vmem>>, vector<8x8xf32>,
    return
  }
  func.func @transform_0(%arg0: i32) -> (i32, i32) {
    %c0_i32 = arith.constant 0 : i32
    %c0_i32_0 = arith.constant 0 : i32
    return %arg0, %c0_i32 : i32, i32
  }
  func.func @transform_1(%arg0: i32) -> (i32, i32, i32) {
    %c0_i32 = arith.constant 0 : i32
    %c0_i32_0 = arith.constant 0 : i32
    %c0_i32_1 = arith.constant 0 : i32
    %c0_i32_2 = arith.constant 0 : i32
    return %c0_i32, %c0_i32_0, %c0_i32_1 : i32, i32, i32
  }
  func.func @transform_2(%arg0: i32) -> (i32, i32) {
    %c0_i32 = arith.constant 0 : i32
    %c0_i32_0 = arith.constant 0 : i32
    return %arg0, %c0_i32 : i32, i32
  }
}

</mosaic_0001>

<llo_original>
// kernel: tpu_custom_call.1
$region0: #{tpu_custom_call.1}
  #allocation0 [shape = 'u32[]', space=smem, size = 0x4, offset = 0x4, fixed_abs, tag = 'smem constant byte address 0x4 - core index']
  #allocation1 [shape = 'u32[144,128]{1,0:T(1,128)}', space=vmem, size = 0x12000, scoped, tag = 'internal scratch']
  %s0 = inlined_call_operand.hbm [shape: f32[8,8], index: 0, kind: input, shape index: {}]
  %s1 = inlined_call_operand.hbm [shape: f32[4,128,128], index: 1, kind: input, shape index: {}]
  %s2 = inlined_call_operand.hbm [shape: f32[8,8], index: 2, kind: output, shape index: {}]
  %s3 = sld [smem:[#allocation0]]
  $region26: #{tpu_custom_call.1} parent=0
    _
  %s5 = ssub.s32 1, %s3
  %s6 = scalar_select 0, %s5, %s3
  $region1: #{tpu_custom_call.1} parent=0
    #allocation2 [shape = 'u8[4096]{0}', space=vmem, size = 0x1000, scoped, tag = 'input window, operand 0, single buffered']
    #allocation3 [shape = 's32[1]{0}', space=sflag, size = 0x4, scoped, tag = 'scoped memory for tpu_custom_call.1']
    #allocation4 [shape = 's32[1]{0}', space=sflag, size = 0x4, scoped, tag = 'scoped memory for tpu_custom_call.1']
    #allocation5 [shape = 'u8[262144]{0}', space=vmem, size = 0x40000, scoped, tag = 'input window, operand 1, single buffered']
    #allocation6 [shape = 's32[1]{0}', space=sflag, size = 0x4, scoped, tag = 'scoped memory for tpu_custom_call.1']
    #allocation7 [shape = 'u8[4096]{0}', space=vmem, size = 0x1000, scoped, tag = 'output window, operand 0, single buffered']
    %7 = vsyncpa [#allocation3], 0
    %8 = vsyncpa [#allocation6], 0
    %9 = vsyncpa [#allocation4], 0
    // Predicated region
    $region2: #{tpu_custom_call.1} parent=1 // pred_check
      _
    $region3: #{tpu_custom_call.1} parent=1 // pred_check_branch
      %11 = sbr.rel (0) target = $region5
    $region4: #{tpu_custom_call.1} parent=1 // pred_region
      %s13 = ssub.s32 128, 128
      %14 = vsyncadd [#allocation3], %s13
      %s16 = sshll.u32 [#allocation2], 4
      %s17 = int_to_ptr.vmem [resolvable:$true] %s16
      %19 = dma.hbm_to_vmem [thread:$0]  %s0, 128, %s17, [#allocation3]
    $region5: #{tpu_custom_call.1} parent=1 // pred_fallthru
      _
    // Predicated region
    $region6: #{tpu_custom_call.1} parent=1 // pred_check
      _
    $region7: #{tpu_custom_call.1} parent=1 // pred_check_branch
      %21 = sbr.rel (0) target = $region9
    $region8: #{tpu_custom_call.1} parent=1 // pred_region
      %s23 = ssub.s32 8192, 8192
      %24 = vsyncadd [#allocation6], %s23
      %s25 = sshll.u32 [#allocation5], 4
      %s26 = int_to_ptr.vmem [resolvable:$true] %s25
      %31 = dma.hbm_to_vmem [thread:$0]  %s1, 8192, %s26, [#allocation6], 128, 128, 8
    $region9: #{tpu_custom_call.1} parent=1 // pred_fallthru
      _
    // Predicated region
    $region10: #{tpu_custom_call.1} parent=1 // pred_check
      _
    $region11: #{tpu_custom_call.1} parent=1 // pred_check_branch
      %33 = sbr.rel (0) target = $region13
    $region12: #{tpu_custom_call.1} parent=1 // pred_region
      %34 = dma.done [#allocation3], 128
    $region13: #{tpu_custom_call.1} parent=1 // pred_fallthru
      _
    // Predicated region
    $region14: #{tpu_custom_call.1} parent=1 // pred_check
      _
    $region15: #{tpu_custom_call.1} parent=1 // pred_check_branch
      %36 = sbr.rel (0) target = $region17
    $region16: #{tpu_custom_call.1} parent=1 // pred_region
      %37 = dma.done [#allocation6], 8192
    $region17: #{tpu_custom_call.1} parent=1 // pred_fallthru
      _
    %v38 = vld [vmem:[#allocation2] sm:$0xff]
    %v39 = vld [vmem:[#allocation5] sm:$0xff]
    %v40 = vld [vmem:[#allocation5 + $0x78] sm:$0x1]
    %v41 = vlaneseq
    %v42 = vshrl.u32 %v41, 7
    %v43 = vsub.s32 0, %v42
    %v44 = vrot.slane %v40, %v43
    %vm45 = vcmask 64512
    %v47 = vsel %vm45, %v38, 0
    %49 = vmatprep.subr.mxu0 0.0
    %50 = vmatpush1.msra.mxu0 0.0
    %51 = vmatprep.subr.mxu0 0.0
    %52 = vmatpush1.msra.mxu0 0.0
    %53 = vmatprep.subr.mxu0 0.0
    %54 = vmatpush1.msra.mxu0 0.0
    %55 = vmatprep.subr.mxu0 0.0
    %56 = vmatpush1.msra.mxu0 0.0
    %57 = vmatprep.subr.mxu0 0.0
    %58 = vmatpush1.msra.mxu0 0.0
    %59 = vmatprep.subr.mxu0 0.0
    %60 = vmatpush1.msra.mxu0 0.0
    %61 = vmatprep.subr.mxu0 0.0
    %62 = vmatpush1.msra.mxu0 0.0
    %63 = vmatprep.subr.mxu0 0.0
    %64 = vmatpush1.msra.mxu0 0.0
    %65 = vmatprep.subr.mxu0 0.0
    %66 = vmatpush1.msra.mxu0 0.0
    %67 = vmatprep.subr.mxu0 0.0
    %68 = vmatpush1.msra.mxu0 0.0
    %69 = vmatprep.subr.mxu0 0.0
    %70 = vmatpush1.msra.mxu0 0.0
    %71 = vmatprep.subr.mxu0 0.0
    %72 = vmatpush1.msra.mxu0 0.0
    %73 = vmatprep.subr.mxu0 0.0
    %74 = vmatpush1.msra.mxu0 0.0
    %75 = vmatprep.subr.mxu0 0.0
    %76 = vmatpush1.msra.mxu0 0.0
    %77 = vmatprep.subr.mxu0 0.0
    %78 = vmatpush1.msra.mxu0 0.0
    %79 = vmatprep.subr.mxu0 0.0
    %80 = vmatpush1.msra.mxu0 %v39
    %81 = vmatprep.subr.mxu0 0.0
    %82 = vmatpush2.msra.mxu0 0.0
    %83 = vmatprep.subr.mxu0 0.0
    %84 = vmatpush2.msra.mxu0 0.0
    %85 = vmatprep.subr.mxu0 0.0
    %86 = vmatpush2.msra.mxu0 0.0
    %87 = vmatprep.subr.mxu0 0.0
    %88 = vmatpush2.msra.mxu0 0.0
    %89 = vmatprep.subr.mxu0 0.0
    %90 = vmatpush2.msra.mxu0 0.0
    %91 = vmatprep.subr.mxu0 0.0
    %92 = vmatpush2.msra.mxu0 0.0
    %93 = vmatprep.subr.mxu0 0.0
    %94 = vmatpush2.msra.mxu0 0.0
    %95 = vmatprep.subr.mxu0 0.0
    %96 = vmatpush2.msra.mxu0 0.0
    %97 = vmatprep.subr.mxu0 0.0
    %98 = vmatpush2.msra.mxu0 0.0
    %99 = vmatprep.subr.mxu0 0.0
    %100 = vmatpush2.msra.mxu0 0.0
    %101 = vmatprep.subr.mxu0 0.0
    %102 = vmatpush2.msra.mxu0 0.0
    %103 = vmatprep.subr.mxu0 0.0
    %104 = vmatpush2.msra.mxu0 0.0
    %105 = vmatprep.subr.mxu0 0.0
    %106 = vmatpush2.msra.mxu0 0.0
    %107 = vmatprep.subr.mxu0 0.0
    %108 = vmatpush2.msra.mxu0 0.0
    %109 = vmatprep.subr.mxu0 0.0
    %110 = vmatpush2.msra.mxu0 0.0
    %111 = vmatprep.subr.mxu0 0.0
    %112 = vmatpush2.msra.mxu0 0.0
    %113 = vmatprep.mubr.f32.mxu0 0.0
    %114 = vmatmul.mubr.f32.gmra.mxu0 %v47
    %v115 = vpop.f32.mrf.mxu0
    %v116 = vadd.f32 %v44, %v115
    %v117 = vpop.f32.mrf.mxu0
    %118 = vdwg.mxu0
    %v119 = vmax.f32 %v116, 0.0
    %s120 = scalar_lea.vmem [#allocation5], 128
    %v121 = vld [vmem:[%s120] sm:$0xff]
    %v122 = vld [vmem:[%s120 + $0x8] sm:$0xff]
    %v123 = vld [vmem:[%s120 + $0x10] sm:$0xff]
    %v124 = vld [vmem:[%s120 + $0x18] sm:$0xff]
    %v125 = vld [vmem:[%s120 + $0x20] sm:$0xff]
    %v126 = vld [vmem:[%s120 + $0x28] sm:$0xff]
    %v127 = vld [vmem:[%s120 + $0x30] sm:$0xff]
    %v128 = vld [vmem:[%s120 + $0x38] sm:$0xff]
    %v129 = vld [vmem:[%s120 + $0x40] sm:$0xff]
    %v130 = vld [vmem:[%s120 + $0x48] sm:$0xff]
    %v131 = vld [vmem:[%s120 + $0x50] sm:$0xff]
    %v132 = vld [vmem:[%s120 + $0x58] sm:$0xff]
    %v133 = vld [vmem:[%s120 + $0x60] sm:$0xff]
    %v134 = vld [vmem:[%s120 + $0x68] sm:$0xff]
    %v135 = vld [vmem:[%s120 + $0x70] sm:$0xff]
    %v136 = vld [vmem:[%s120 + $0x78] sm:$0xff]
    %v137 = vld [vmem:[%s120 + $0x78] sm:$0x1]
    %v138 = vlaneseq
    %v139 = vshrl.u32 %v138, 7
    %v140 = vsub.s32 0, %v139
    %v141 = vrot.slane %v137, %v140
    %142 = vmatprep.subr.mxu0 0.0
    %143 = vmatpush1.msra.mxu0 %v136
    %144 = vmatprep.subr.mxu0 0.0
    %145 = vmatpush1.msra.mxu0 %v135
    %146 = vmatprep.subr.mxu0 0.0
    %147 = vmatpush1.msra.mxu0 %v134
    %148 = vmatprep.subr.mxu0 0.0
    %149 = vmatpush1.msra.mxu0 %v133
    %150 = vmatprep.subr.mxu0 0.0
    %151 = vmatpush1.msra.mxu0 %v132
    %152 = vmatprep.subr.mxu0 0.0
    %153 = vmatpush1.msra.mxu0 %v131
    %154 = vmatprep.subr.mxu0 0.0
    %155 = vmatpush1.msra.mxu0 %v130
    %156 = vmatprep.subr.mxu0 0.0
    %157 = vmatpush1.msra.mxu0 %v129
    %158 = vmatprep.subr.mxu0 0.0
    %159 = vmatpush1.msra.mxu0 %v128
    %160 = vmatprep.subr.mxu0 0.0
    %161 = vmatpush1.msra.mxu0 %v127
    %162 = vmatprep.subr.mxu0 0.0
    %163 = vmatpush1.msra.mxu0 %v126
    %164 = vmatprep.subr.mxu0 0.0
    %165 = vmatpush1.msra.mxu0 %v125
    %166 = vmatprep.subr.mxu0 0.0
    %167 = vmatpush1.msra.mxu0 %v124
    %168 = vmatprep.subr.mxu0 0.0
    %169 = vmatpush1.msra.mxu0 %v123
    %170 = vmatprep.subr.mxu0 0.0
    %171 = vmatpush1.msra.mxu0 %v122
    %172 = vmatprep.subr.mxu0 0.0
    %173 = vmatpush1.msra.mxu0 %v121
    %174 = vmatprep.subr.mxu0 0.0
    %175 = vmatpush2.msra.mxu0 0.0
    %176 = vmatprep.subr.mxu0 0.0
    %177 = vmatpush2.msra.mxu0 0.0
    %178 = vmatprep.subr.mxu0 0.0
    %179 = vmatpush2.msra.mxu0 0.0
    %180 = vmatprep.subr.mxu0 0.0
    %181 = vmatpush2.msra.mxu0 0.0
    %182 = vmatprep.subr.mxu0 0.0
    %183 = vmatpush2.msra.mxu0 0.0
    %184 = vmatprep.subr.mxu0 0.0
    %185 = vmatpush2.msra.mxu0 0.0
    %186 = vmatprep.subr.mxu0 0.0
    %187 = vmatpush2.msra.mxu0 0.0
    %188 = vmatprep.subr.mxu0 0.0
    %189 = vmatpush2.msra.mxu0 0.0
    %190 = vmatprep.subr.mxu0 0.0
    %191 = vmatpush2.msra.mxu0 0.0
    %192 = vmatprep.subr.mxu0 0.0
    %193 = vmatpush2.msra.mxu0 0.0
    %194 = vmatprep.subr.mxu0 0.0
    %195 = vmatpush2.msra.mxu0 0.0
    %196 = vmatprep.subr.mxu0 0.0
    %197 = vmatpush2.msra.mxu0 0.0
    %198 = vmatprep.subr.mxu0 0.0
    %199 = vmatpush2.msra.mxu0 0.0
    %200 = vmatprep.subr.mxu0 0.0
    %201 = vmatpush2.msra.mxu0 0.0
    %202 = vmatprep.subr.mxu0 0.0
    %203 = vmatpush2.msra.mxu0 0.0
    %204 = vmatprep.subr.mxu0 0.0
    %205 = vmatpush2.msra.mxu0 0.0
    %206 = vmatprep.mubr.f32.mxu0 0.0
    %207 = vmatmul.mubr.f32.gmra.mxu0 %v119
    %v208 = vpop.f32.mrf.mxu0
    %v209 = vadd.f32 %v141, %v208
    %v210 = vpop.f32.mrf.mxu0
    %211 = vdwg.mxu0
    %v212 = vmax.f32 %v209, 0.0
    %s213 = scalar_lea.vmem [#allocation5], 256
    %v214 = vld [vmem:[%s213] sm:$0xff]
    %v215 = vld [vmem:[%s213 + $0x8] sm:$0xff]
    %v216 = vld [vmem:[%s213 + $0x10] sm:$0xff]
    %v217 = vld [vmem:[%s213 + $0x18] sm:$0xff]
    %v218 = vld [vmem:[%s213 + $0x20] sm:$0xff]
    %v219 = vld [vmem:[%s213 + $0x28] sm:$0xff]
    %v220 = vld [vmem:[%s213 + $0x30] sm:$0xff]
    %v221 = vld [vmem:[%s213 + $0x38] sm:$0xff]
    %v222 = vld [vmem:[%s213 + $0x40] sm:$0xff]
    %v223 = vld [vmem:[%s213 + $0x48] sm:$0xff]
    %v224 = vld [vmem:[%s213 + $0x50] sm:$0xff]
    %v225 = vld [vmem:[%s213 + $0x58] sm:$0xff]
    %v226 = vld [vmem:[%s213 + $0x60] sm:$0xff]
    %v227 = vld [vmem:[%s213 + $0x68] sm:$0xff]
    %v228 = vld [vmem:[%s213 + $0x70] sm:$0xff]
    %v229 = vld [vmem:[%s213 + $0x78] sm:$0xff]
    %v230 = vld [vmem:[%s213 + $0x78] sm:$0x1]
    %v231 = vlaneseq
    %v232 = vshrl.u32 %v231, 7
    %v233 = vsub.s32 0, %v232
    %v234 = vrot.slane %v230, %v233
    %235 = vmatprep.subr.mxu0 0.0
    %236 = vmatpush1.msra.mxu0 %v229
    %237 = vmatprep.subr.mxu0 0.0
    %238 = vmatpush1.msra.mxu0 %v228
    %239 = vmatprep.subr.mxu0 0.0
    %240 = vmatpush1.msra.mxu0 %v227
    %241 = vmatprep.subr.mxu0 0.0
    %242 = vmatpush1.msra.mxu0 %v226
    %243 = vmatprep.subr.mxu0 0.0
    %244 = vmatpush1.msra.mxu0 %v225
    %245 = vmatprep.subr.mxu0 0.0
    %246 = vmatpush1.msra.mxu0 %v224
    %247 = vmatprep.subr.mxu0 0.0
    %248 = vmatpush1.msra.mxu0 %v223
    %249 = vmatprep.subr.mxu0 0.0
    %250 = vmatpush1.msra.mxu0 %v222
    %251 = vmatprep.subr.mxu0 0.0
    %252 = vmatpush1.msra.mxu0 %v221
    %253 = vmatprep.subr.mxu0 0.0
    %254 = vmatpush1.msra.mxu0 %v220
    %255 = vmatprep.subr.mxu0 0.0
    %256 = vmatpush1.msra.mxu0 %v219
    %257 = vmatprep.subr.mxu0 0.0
    %258 = vmatpush1.msra.mxu0 %v218
    %259 = vmatprep.subr.mxu0 0.0
    %260 = vmatpush1.msra.mxu0 %v217
    %261 = vmatprep.subr.mxu0 0.0
    %262 = vmatpush1.msra.mxu0 %v216
    %263 = vmatprep.subr.mxu0 0.0
    %264 = vmatpush1.msra.mxu0 %v215
    %265 = vmatprep.subr.mxu0 0.0
    %266 = vmatpush1.msra.mxu0 %v214
    %267 = vmatprep.subr.mxu0 0.0
    %268 = vmatpush2.msra.mxu0 0.0
    %269 = vmatprep.subr.mxu0 0.0
    %270 = vmatpush2.msra.mxu0 0.0
    %271 = vmatprep.subr.mxu0 0.0
    %272 = vmatpush2.msra.mxu0 0.0
    %273 = vmatprep.subr.mxu0 0.0
    %274 = vmatpush2.msra.mxu0 0.0
    %275 = vmatprep.subr.mxu0 0.0
    %276 = vmatpush2.msra.mxu0 0.0
    %277 = vmatprep.subr.mxu0 0.0
    %278 = vmatpush2.msra.mxu0 0.0
    %279 = vmatprep.subr.mxu0 0.0
    %280 = vmatpush2.msra.mxu0 0.0
    %281 = vmatprep.subr.mxu0 0.0
    %282 = vmatpush2.msra.mxu0 0.0
    %283 = vmatprep.subr.mxu0 0.0
    %284 = vmatpush2.msra.mxu0 0.0
    %285 = vmatprep.subr.mxu0 0.0
    %286 = vmatpush2.msra.mxu0 0.0
    %287 = vmatprep.subr.mxu0 0.0
    %288 = vmatpush2.msra.mxu0 0.0
    %289 = vmatprep.subr.mxu0 0.0
    %290 = vmatpush2.msra.mxu0 0.0
    %291 = vmatprep.subr.mxu0 0.0
    %292 = vmatpush2.msra.mxu0 0.0
    %293 = vmatprep.subr.mxu0 0.0
    %294 = vmatpush2.msra.mxu0 0.0
    %295 = vmatprep.subr.mxu0 0.0
    %296 = vmatpush2.msra.mxu0 0.0
    %297 = vmatprep.subr.mxu0 0.0
    %298 = vmatpush2.msra.mxu0 0.0
    %299 = vmatprep.mubr.f32.mxu0 0.0
    %300 = vmatmul.mubr.f32.gmra.mxu0 %v212
    %v301 = vpop.f32.mrf.mxu0
    %v302 = vadd.f32 %v234, %v301
    %v303 = vpop.f32.mrf.mxu0
    %304 = vdwg.mxu0
    %v305 = vmax.f32 %v302, 0.0
    %s306 = scalar_lea.vmem [#allocation5], 384
    %v307 = vld [vmem:[%s306] sm:$0xff]
    %v308 = vld [vmem:[%s306 + $0x8] sm:$0xff]
    %v309 = vld [vmem:[%s306 + $0x10] sm:$0xff]
    %v310 = vld [vmem:[%s306 + $0x18] sm:$0xff]
    %v311 = vld [vmem:[%s306 + $0x20] sm:$0xff]
    %v312 = vld [vmem:[%s306 + $0x28] sm:$0xff]
    %v313 = vld [vmem:[%s306 + $0x30] sm:$0xff]
    %v314 = vld [vmem:[%s306 + $0x38] sm:$0xff]
    %v315 = vld [vmem:[%s306 + $0x40] sm:$0xff]
    %v316 = vld [vmem:[%s306 + $0x48] sm:$0xff]
    %v317 = vld [vmem:[%s306 + $0x50] sm:$0xff]
    %v318 = vld [vmem:[%s306 + $0x58] sm:$0xff]
    %v319 = vld [vmem:[%s306 + $0x60] sm:$0xff]
    %v320 = vld [vmem:[%s306 + $0x68] sm:$0xff]
    %v321 = vld [vmem:[%s306 + $0x70] sm:$0xff]
    %v322 = vld [vmem:[%s306 + $0x78] sm:$0xff]
    %v323 = vld [vmem:[%s306 + $0x78] sm:$0x1]
    %v324 = vlaneseq
    %v325 = vshrl.u32 %v324, 7
    %v326 = vsub.s32 0, %v325
    %v327 = vrot.slane %v323, %v326
    %328 = vmatprep.subr.mxu0 0.0
    %329 = vmatpush1.msra.mxu0 %v322
    %330 = vmatprep.subr.mxu0 0.0
    %331 = vmatpush1.msra.mxu0 %v321
    %332 = vmatprep.subr.mxu0 0.0
    %333 = vmatpush1.msra.mxu0 %v320
    %334 = vmatprep.subr.mxu0 0.0
    %335 = vmatpush1.msra.mxu0 %v319
    %336 = vmatprep.subr.mxu0 0.0
    %337 = vmatpush1.msra.mxu0 %v318
    %338 = vmatprep.subr.mxu0 0.0
    %339 = vmatpush1.msra.mxu0 %v317
    %340 = vmatprep.subr.mxu0 0.0
    %341 = vmatpush1.msra.mxu0 %v316
    %342 = vmatprep.subr.mxu0 0.0
    %343 = vmatpush1.msra.mxu0 %v315
    %344 = vmatprep.subr.mxu0 0.0
    %345 = vmatpush1.msra.mxu0 %v314
    %346 = vmatprep.subr.mxu0 0.0
    %347 = vmatpush1.msra.mxu0 %v313
    %348 = vmatprep.subr.mxu0 0.0
    %349 = vmatpush1.msra.mxu0 %v312
    %350 = vmatprep.subr.mxu0 0.0
    %351 = vmatpush1.msra.mxu0 %v311
    %352 = vmatprep.subr.mxu0 0.0
    %353 = vmatpush1.msra.mxu0 %v310
    %354 = vmatprep.subr.mxu0 0.0
    %355 = vmatpush1.msra.mxu0 %v309
    %356 = vmatprep.subr.mxu0 0.0
    %357 = vmatpush1.msra.mxu0 %v308
    %358 = vmatprep.subr.mxu0 0.0
    %359 = vmatpush1.msra.mxu0 %v307
    %360 = vmatprep.subr.mxu0 0.0
    %361 = vmatpush2.msra.mxu0 0.0
    %362 = vmatprep.subr.mxu0 0.0
    %363 = vmatpush2.msra.mxu0 0.0
    %364 = vmatprep.subr.mxu0 0.0
    %365 = vmatpush2.msra.mxu0 0.0
    %366 = vmatprep.subr.mxu0 0.0
    %367 = vmatpush2.msra.mxu0 0.0
    %368 = vmatprep.subr.mxu0 0.0
    %369 = vmatpush2.msra.mxu0 0.0
    %370 = vmatprep.subr.mxu0 0.0
    %371 = vmatpush2.msra.mxu0 0.0
    %372 = vmatprep.subr.mxu0 0.0
    %373 = vmatpush2.msra.mxu0 0.0
    %374 = vmatprep.subr.mxu0 0.0
    %375 = vmatpush2.msra.mxu0 0.0
    %376 = vmatprep.subr.mxu0 0.0
    %377 = vmatpush2.msra.mxu0 0.0
    %378 = vmatprep.subr.mxu0 0.0
    %379 = vmatpush2.msra.mxu0 0.0
    %380 = vmatprep.subr.mxu0 0.0
    %381 = vmatpush2.msra.mxu0 0.0
    %382 = vmatprep.subr.mxu0 0.0
    %383 = vmatpush2.msra.mxu0 0.0
    %384 = vmatprep.subr.mxu0 0.0
    %385 = vmatpush2.msra.mxu0 0.0
    %386 = vmatprep.subr.mxu0 0.0
    %387 = vmatpush2.msra.mxu0 0.0
    %388 = vmatprep.subr.mxu0 0.0
    %389 = vmatpush2.msra.mxu0 0.0
    %390 = vmatprep.subr.mxu0 0.0
    %391 = vmatpush2.msra.mxu0 0.0
    %392 = vmatprep.mubr.f32.mxu0 0.0
    %393 = vmatmul.mubr.f32.gmra.mxu0 %v305
    %v394 = vpop.f32.mrf.mxu0
    %v395 = vadd.f32 %v327, %v394
    %v396 = vpop.f32.mrf.mxu0
    %397 = vdwg.mxu0
    %v398 = vtanh.pop %v395
    %v399 = vmul.f32 %v398, 2.0
    %400 = vst.msk [vmem:[#allocation7] sm:$0xff] %vm45, %v399
    // Predicated region
    $region18: #{tpu_custom_call.1} parent=1 // pred_check
      _
    $region19: #{tpu_custom_call.1} parent=1 // pred_check_branch
      %402 = sbr.rel (0) target = $region21
    $region20: #{tpu_custom_call.1} parent=1 // pred_region
      %s404 = ssub.s32 128, 128
      %405 = vsyncadd [#allocation4], %s404
      %s407 = sshll.u32 [#allocation7], 4
      %s408 = int_to_ptr.vmem [resolvable:$true] %s407
      %410 = dma.vmem_to_hbm [thread:$0]  %s408, 128, %s2, [#allocation4]
    $region21: #{tpu_custom_call.1} parent=1 // pred_fallthru
      _
    // Predicated region
    $region22: #{tpu_custom_call.1} parent=1 // pred_check
      _
    $region23: #{tpu_custom_call.1} parent=1 // pred_check_branch
      %412 = sbr.rel (0) target = $region25
    $region24: #{tpu_custom_call.1} parent=1 // pred_region
      %413 = dma.done [#allocation4], 128
    $region25: #{tpu_custom_call.1} parent=1 // pred_fallthru
      _
    %414 = vsyncpa [#allocation3], 1
    %415 = vsyncpa [#allocation6], 1
    %416 = vsyncpa [#allocation4], 1

</llo_original>
